<compile_context>
chip_gen: v7x
topology: tpu7x:2x2x1
jax: 0.10.0
libtpu: 0.0.40
codegen_flags: <defaults>
</compile_context>

<pallas_src>
import math

import jax
import jax.numpy as jnp
from jax.experimental import pallas as pl
from jax.experimental.pallas import tpu as pltpu

# ---------------- config (small, consistent with Actor.__init__) -------------
BATCH = 8
N_STATES = 16
HIDDEN = 32
N_ACTIONS = 8
MAX_ACTION = 1.0

LANES = 128                          # TPU lane width
ACT_OFF = N_STATES                   # action lanes 16..23 (same lanes as eps)
LOGPI_LANE = N_STATES + N_ACTIONS    # lane 24 carries log_pi

_LOG_SQRT_2PI = 0.5 * math.log(2.0 * math.pi)
_LOG2 = math.log(2.0)

# consts slab row indices
_ROW_B1, _ROW_B2, _ROW_B3, _ROW_STD, _ROW_EPS_MASK, _ROW_LOGPI_MASK, _ROW_OUT_BIAS = range(7)


def _softplus(x):
    # numerically stable softplus: max(x, 0) + log1p(exp(-|x|))
    return jnp.maximum(x, 0.0) + jnp.log1p(jnp.exp(-jnp.abs(x)))


# --------------------------------- kernel ------------------------------------
def actor_kernel(x_ref, w_ref, c_ref, out_ref):
    # x: (bm, 128) f32 packed slab -- state lanes 0..15, eps lanes 16..23, rest 0
    x = x_ref[...]

    b1 = c_ref[_ROW_B1:_ROW_B1 + 1, :]
    b2 = c_ref[_ROW_B2:_ROW_B2 + 1, :]
    b3 = c_ref[_ROW_B3:_ROW_B3 + 1, :]
    std = c_ref[_ROW_STD:_ROW_STD + 1, :]                 # exp(log_std), action lanes only
    eps_mask = c_ref[_ROW_EPS_MASK:_ROW_EPS_MASK + 1, :]  # 1 on lanes 16..23
    logpi_mask = c_ref[_ROW_LOGPI_MASK:_ROW_LOGPI_MASK + 1, :]
    out_bias = c_ref[_ROW_OUT_BIAS:_ROW_OUT_BIAS + 1, :]

    # fc1 -> relu  (bf16 MXU inputs, f32 accumulate; eps lanes hit zero w1 rows)
    h1 = jnp.dot(x.astype(jnp.bfloat16), w_ref[0],
                 preferred_element_type=jnp.float32) + b1
    h1 = jnp.maximum(h1, 0.0)

    # fc2 -> relu
    h2 = jnp.dot(h1.astype(jnp.bfloat16), w_ref[1],
                 preferred_element_type=jnp.float32) + b2
    h2 = jnp.maximum(h2, 0.0)

    # fc3 -> tanh -> mean; w3/b3 columns are placed at lanes 16..23, so mean is
    # nonzero only on the action lanes (padded lanes: z==0 -> tanh(0)==0).
    z = jnp.dot(h2.astype(jnp.bfloat16), w_ref[2],
                preferred_element_type=jnp.float32) + b3
    mean = MAX_ACTION * jnp.tanh(z)

    # rsample: a = mean + std * eps.  eps lives in lanes 16..23 of x (f32, exact);
    # std is zero outside the action lanes so a == 0 exactly in padded lanes.
    eps = x * eps_mask
    a = mean + std * eps

    # TODO(synk): if large-B profiles show the EUP slot saturating (tanh/exp/log1p
    # over 120 padded lanes), pack the 8 real action lanes of 16 rows into dense
    # vregs (pltpu.einshape, XLU slot) before this tail and unpack only a_clamped.

    # Normal.log_prob(a).sum(1): (a-mean)/std == eps, no divide.  The constant
    # -(sum(log_std) + N*0.5*log(2pi)) is pre-folded into out_bias.
    # tanh-squash correction: 2*(log2 - a - softplus(-2a)); ~0 in padded lanes.
    corr = 2.0 * (_LOG2 - a - _softplus(-2.0 * a))
    log_pi_part = jnp.sum(-0.5 * (eps * eps) - corr, axis=1, keepdims=True)

    # clamp action (padded lanes remain exactly 0)
    a_clamped = jnp.clip(a, -MAX_ACTION, MAX_ACTION)

    # single lane-dense output slab:
    #   lanes 16..23 : clamped action
    #   lane  24     : log_pi (constant term added via out_bias)
    out_ref[...] = a_clamped + log_pi_part * logpi_mask + out_bias


# ------------------------------ param handling -------------------------------
def init_params(key):
    """Raw f32 params, PyTorch Linear default init, weights stored (in, out)."""
    keys = jax.random.split(key, 6)

    def linear(kw, kb, fan_in, fan_out):
        bound = 1.0 / math.sqrt(fan_in)
        w = jax.random.uniform(kw, (fan_in, fan_out), jnp.float32, -bound, bound)
        b = jax.random.uniform(kb, (1, fan_out), jnp.float32, -bound, bound)
        return w, b

    w1, b1 = linear(keys[0], keys[1], N_STATES, HIDDEN)
    w2, b2 = linear(keys[2], keys[3], HIDDEN, HIDDEN)
    w3, b3 = linear(keys[4], keys[5], HIDDEN, N_ACTIONS)
    log_std = jnp.zeros((1, N_ACTIONS), jnp.float32)   # nn.Parameter(torch.zeros(1, n_actions))
    return dict(w1=w1, b1=b1, w2=w2, b2=b2, w3=w3, b3=b3, log_std=log_std)


def _pad2(x, rows, cols):
    return jnp.pad(x, ((0, rows - x.shape[0]), (0, cols - x.shape[1])))


def prepare_params(raw):
    """Build the stacked bf16 weight array and the (8,128) f32 consts slab.

    Call once per parameter update, NOT per forward call.
    """
    # w1: rows 0..15 real (state lanes); rows 16..23 (eps lanes) and beyond are 0,
    # so the packed eps lanes contribute nothing to fc1.
    w1 = _pad2(raw["w1"], LANES, LANES)
    w2 = _pad2(raw["w2"], LANES, LANES)
    # w3 output columns shifted to the action lanes (16..23).
    w3 = jnp.zeros((LANES, LANES), jnp.float32)
    w3 = w3.at[:HIDDEN, ACT_OFF:ACT_OFF + N_ACTIONS].set(raw["w3"])
    w = jnp.stack([w1, w2, w3], axis=0).astype(jnp.bfloat16)      # (3, 128, 128)

    log_std = raw["log_std"][0]                                   # (N_ACTIONS,)
    consts = jnp.zeros((8, LANES), jnp.float32)
    consts = consts.at[_ROW_B1, :HIDDEN].set(raw["b1"][0])
    consts = consts.at[_ROW_B2, :HIDDEN].set(raw["b2"][0])
    consts = consts.at[_ROW_B3, ACT_OFF:ACT_OFF + N_ACTIONS].set(raw["b3"][0])
    consts = consts.at[_ROW_STD, ACT_OFF:ACT_OFF + N_ACTIONS].set(jnp.exp(log_std))
    consts = consts.at[_ROW_EPS_MASK, ACT_OFF:ACT_OFF + N_ACTIONS].set(1.0)
    consts = consts.at[_ROW_LOGPI_MASK, LOGPI_LANE].set(1.0)
    # constant part of sum(Normal.log_prob): -(sum(log_std) + N * 0.5*log(2pi))
    const_term = jnp.sum(log_std) + N_ACTIONS * _LOG_SQRT_2PI
    consts = consts.at[_ROW_OUT_BIAS, LOGPI_LANE].set(-const_term)

    return dict(w=w, consts=consts)


def pack_inputs(s, eps):
    """Pack state + eps into the (B,128) slab the kernel consumes.

    In a real SAC loop the replay buffer / sampler should keep this layout
    persistently so no per-forward copy is needed (state lanes 0..15, eps
    lanes 16..23).
    """
    B = s.shape[0]
    x = jnp.zeros((B, LANES), jnp.float32)
    x = x.at[:, :N_STATES].set(s.astype(jnp.float32))
    x = x.at[:, N_STATES:N_STATES + N_ACTIONS].set(eps.astype(jnp.float32))
    return x


# --------------------------------- wrapper -----------------------------------
def _round8(n):
    return ((n + 7) // 8) * 8


def _pick_block_rows(B):
    if B < 256:
        # One grid step: per-step overhead dominates this regime anyway.
        return _round8(B)
    # >= 2 grid steps so the "parallel" batch axis shards across both v7x TCs,
    # capped at 1024 rows (step-overhead amortization; VMEM is a non-issue).
    return min(1024, _round8(pl.cdiv(B, 2)))


def actor_forward(x_packed, kparams, *, block_rows=None):
    """x_packed: (B, 128) f32 from pack_inputs(); kparams: prepare_params(...)."""
    B = x_packed.shape[0]
    bm = block_rows if block_rows is not None else _pick_block_rows(B)
    Bp = ((B + bm - 1) // bm) * bm
    grid = (Bp // bm,)

    x_p = x_packed if Bp == B else jnp.pad(x_packed, ((0, Bp - B), (0, 0)))

    out = pl.pallas_call(
        actor_kernel,
        out_shape=jax.ShapeDtypeStruct((Bp, LANES), jnp.float32),
        grid=grid,
        in_specs=[
            pl.BlockSpec((bm, LANES), lambda i: (i, 0)),          # packed x
            pl.BlockSpec((3, LANES, LANES), lambda i: (0, 0, 0)),  # stacked weights (bf16)
            pl.BlockSpec((8, LANES), lambda i: (0, 0)),            # consts slab (f32)
        ],
        out_specs=pl.BlockSpec((bm, LANES), lambda i: (i, 0)),
        compiler_params=pltpu.CompilerParams(
            dimension_semantics=("parallel",)),    # shard batch tiles across TCs (v7x)
    )(x_p, kparams["w"], kparams["consts"])

    a = out[:B, ACT_OFF:ACT_OFF + N_ACTIONS]
    log_pi = out[:B, LOGPI_LANE:LOGPI_LANE + 1]
    return a, log_pi


# ------------------------------ pure-JAX reference ----------------------------
def actor_reference(s, raw, eps):
    """Same math (incl. bf16 matmul inputs) in plain jnp, for validation."""
    def dot_bf16(x, w):
        return jnp.dot(x.astype(jnp.bfloat16), w.astype(jnp.bfloat16),
                       preferred_element_type=jnp.float32)

    h1 = jnp.maximum(dot_bf16(s, raw["w1"]) + raw["b1"], 0.0)
    h2 = jnp.maximum(dot_bf16(h1, raw["w2"]) + raw["b2"], 0.0)
    mean = MAX_ACTION * jnp.tanh(dot_bf16(h2, raw["w3"]) + raw["b3"])
    log_std = raw["log_std"]
    std = jnp.exp(log_std)
    a = mean + std * eps
    log_prob = -0.5 * eps * eps - log_std - _LOG_SQRT_2PI
    log_pi = jnp.sum(log_prob, axis=1, keepdims=True)
    corr = 2.0 * (_LOG2 - a - _softplus(-2.0 * a))
    log_pi = log_pi - jnp.sum(corr, axis=1, keepdims=True)
    return jnp.clip(a, -MAX_ACTION, MAX_ACTION), log_pi


if __name__ == "__main__":
    key = jax.random.PRNGKey(0)
    k_params, k_s, k_eps = jax.random.split(key, 3)

    raw = init_params(k_params)
    kparams = prepare_params(raw)        # done once per param update
    s = jax.random.normal(k_s, (BATCH, N_STATES), jnp.float32)
    eps = jax.random.normal(k_eps, (BATCH, N_ACTIONS), jnp.float32)

    x = pack_inputs(s, eps)              # producer-side packing (once per batch)
    a, log_pi = actor_forward(x, kparams)
    jax.block_until_ready((a, log_pi))

    a_ref, lp_ref = actor_reference(s, raw, eps)

    assert a.shape == (BATCH, N_ACTIONS)
    assert log_pi.shape == (BATCH, 1)
    assert bool(jnp.all(jnp.isfinite(a))) and bool(jnp.all(jnp.isfinite(log_pi)))
    assert bool(jnp.allclose(a, a_ref, atol=5e-3, rtol=5e-3))
    assert bool(jnp.allclose(log_pi, lp_ref, atol=2e-2, rtol=2e-2))
    print("KERNEL_OK")
</pallas_src>

<mosaic_0001>
module attributes {stable_mosaic.version = 11 : i64} {
  func.func @actor_kernel(%arg0: i32, %arg1: memref<8x128xf32, #tpu.memory_space<vmem>>, %arg2: memref<3x128x128xbf16, #tpu.memory_space<vmem>>, %arg3: memref<8x128xf32, #tpu.memory_space<vmem>>, %arg4: memref<8x128xf32, #tpu.memory_space<vmem>>) attributes {dimension_semantics = [#tpu.dimension_semantics<parallel>], iteration_bounds = array<i64: 1>, scalar_prefetch = 0 : i64, scratch_operands = 0 : i64, tpu.core_type = #tpu.core_type<tc>, window_params = [{transform_indices = @transform_0, window_bounds = array<i64: 8, 128>}, {pipeline_mode = #tpu.pipeline_mode<synchronous>, transform_indices = @transform_1, window_bounds = array<i64: 3, 128, 128>}, {pipeline_mode = #tpu.pipeline_mode<synchronous>, transform_indices = @transform_2, window_bounds = array<i64: 8, 128>}, {transform_indices = @transform_3, window_bounds = array<i64: 8, 128>}]} {
    %c0 = arith.constant 0 : index
    %c0_0 = arith.constant 0 : index
    %0 = vector.load %arg1[%c0, %c0_0] : memref<8x128xf32, #tpu.memory_space<vmem>>, vector<8x128xf32>
    %c0_1 = arith.constant 0 : index
    %c0_2 = arith.constant 0 : index
    %1 = vector.load %arg3[%c0_1, %c0_2] : memref<8x128xf32, #tpu.memory_space<vmem>>, vector<1x128xf32>
    %c1 = arith.constant 1 : index
    %c0_3 = arith.constant 0 : index
    %2 = vector.load %arg3[%c1, %c0_3] : memref<8x128xf32, #tpu.memory_space<vmem>>, vector<1x128xf32>
    %c2 = arith.constant 2 : index
    %c0_4 = arith.constant 0 : index
    %3 = vector.load %arg3[%c2, %c0_4] : memref<8x128xf32, #tpu.memory_space<vmem>>, vector<1x128xf32>
    %c3 = arith.constant 3 : index
    %c0_5 = arith.constant 0 : index
    %4 = vector.load %arg3[%c3, %c0_5] : memref<8x128xf32, #tpu.memory_space<vmem>>, vector<1x128xf32>
    %c4 = arith.constant 4 : index
    %c0_6 = arith.constant 0 : index
    %5 = vector.load %arg3[%c4, %c0_6] : memref<8x128xf32, #tpu.memory_space<vmem>>, vector<1x128xf32>
    %c5 = arith.constant 5 : index
    %c0_7 = arith.constant 0 : index
    %6 = vector.load %arg3[%c5, %c0_7] : memref<8x128xf32, #tpu.memory_space<vmem>>, vector<1x128xf32>
    %c6 = arith.constant 6 : index
    %c0_8 = arith.constant 0 : index
    %7 = vector.load %arg3[%c6, %c0_8] : memref<8x128xf32, #tpu.memory_space<vmem>>, vector<1x128xf32>
    %8 = arith.truncf %0 : vector<8x128xf32> to vector<8x128xbf16>
    %c0_9 = arith.constant 0 : index
    %c0_10 = arith.constant 0 : index
    %c0_11 = arith.constant 0 : index
    %9 = vector.load %arg2[%c0_9, %c0_10, %c0_11] : memref<3x128x128xbf16, #tpu.memory_space<vmem>>, vector<1x128x128xbf16>
    %10 = vector.shape_cast %9 : vector<1x128x128xbf16> to vector<128x128xbf16>
    %cst = arith.constant dense<0.000000e+00> : vector<8x128xf32>
    %11 = tpu.matmul %8, %10, %cst {dimension_numbers = #tpu.dot_dimension_numbers<[1], [0], [0], [1], [0, 0, 1, 1], [], []>} : vector<8x128xbf16>, vector<128x128xbf16>, vector<8x128xf32> -> vector<8x128xf32>
    %12 = vector.broadcast %1 : vector<1x128xf32> to vector<8x128xf32>
    %13 = arith.addf %11, %12 : vector<8x128xf32>
    %cst_12 = arith.constant 0.000000e+00 : f32
    %14 = vector.broadcast %cst_12 : f32 to vector<8x128xf32>
    %15 = arith.maximumf %13, %14 : vector<8x128xf32>
    %16 = arith.truncf %15 : vector<8x128xf32> to vector<8x128xbf16>
    %c1_13 = arith.constant 1 : index
    %c0_14 = arith.constant 0 : index
    %c0_15 = arith.constant 0 : index
    %17 = vector.load %arg2[%c1_13, %c0_14, %c0_15] : memref<3x128x128xbf16, #tpu.memory_space<vmem>>, vector<1x128x128xbf16>
    %18 = vector.shape_cast %17 : vector<1x128x128xbf16> to vector<128x128xbf16>
    %cst_16 = arith.constant dense<0.000000e+00> : vector<8x128xf32>
    %19 = tpu.matmul %16, %18, %cst_16 {dimension_numbers = #tpu.dot_dimension_numbers<[1], [0], [0], [1], [0, 0, 1, 1], [], []>} : vector<8x128xbf16>, vector<128x128xbf16>, vector<8x128xf32> -> vector<8x128xf32>
    %20 = vector.broadcast %2 : vector<1x128xf32> to vector<8x128xf32>
    %21 = arith.addf %19, %20 : vector<8x128xf32>
    %cst_17 = arith.constant 0.000000e+00 : f32
    %22 = vector.broadcast %cst_17 : f32 to vector<8x128xf32>
    %23 = arith.maximumf %21, %22 : vector<8x128xf32>
    %24 = arith.truncf %23 : vector<8x128xf32> to vector<8x128xbf16>
    %c2_18 = arith.constant 2 : index
    %c0_19 = arith.constant 0 : index
    %c0_20 = arith.constant 0 : index
    %25 = vector.load %arg2[%c2_18, %c0_19, %c0_20] : memref<3x128x128xbf16, #tpu.memory_space<vmem>>, vector<1x128x128xbf16>
    %26 = vector.shape_cast %25 : vector<1x128x128xbf16> to vector<128x128xbf16>
    %cst_21 = arith.constant dense<0.000000e+00> : vector<8x128xf32>
    %27 = tpu.matmul %24, %26, %cst_21 {dimension_numbers = #tpu.dot_dimension_numbers<[1], [0], [0], [1], [0, 0, 1, 1], [], []>} : vector<8x128xbf16>, vector<128x128xbf16>, vector<8x128xf32> -> vector<8x128xf32>
    %28 = vector.broadcast %3 : vector<1x128xf32> to vector<8x128xf32>
    %29 = arith.addf %27, %28 : vector<8x128xf32>
    %30 = math.tanh %29 : vector<8x128xf32>
    %cst_22 = arith.constant 1.000000e+00 : f32
    %31 = vector.broadcast %cst_22 : f32 to vector<8x128xf32>
    %32 = arith.mulf %31, %30 : vector<8x128xf32>
    %33 = vector.broadcast %5 : vector<1x128xf32> to vector<8x128xf32>
    %34 = arith.mulf %0, %33 : vector<8x128xf32>
    %35 = vector.broadcast %4 : vector<1x128xf32> to vector<8x128xf32>
    %36 = arith.mulf %35, %34 : vector<8x128xf32>
    %37 = arith.addf %32, %36 : vector<8x128xf32>
    %cst_23 = arith.constant 0.693147182 : f32
    %38 = vector.broadcast %cst_23 : f32 to vector<8x128xf32>
    %39 = arith.subf %38, %37 : vector<8x128xf32>
    %cst_24 = arith.constant -2.000000e+00 : f32
    %40 = vector.broadcast %cst_24 : f32 to vector<8x128xf32>
    %41 = arith.mulf %40, %37 : vector<8x128xf32>
    %cst_25 = arith.constant 0.000000e+00 : f32
    %42 = vector.broadcast %cst_25 : f32 to vector<8x128xf32>
    %43 = arith.maximumf %41, %42 : vector<8x128xf32>
    %44 = math.absf %41 : vector<8x128xf32>
    %cst_26 = arith.constant 0.000000e+00 : f32
    %45 = vector.broadcast %cst_26 : f32 to vector<8x128xf32>
    %46 = arith.subf %45, %44 : vector<8x128xf32>
    %47 = math.exp %46 : vector<8x128xf32>
    %48 = math.log1p %47 : vector<8x128xf32>
    %49 = arith.addf %43, %48 : vector<8x128xf32>
    %50 = arith.subf %39, %49 : vector<8x128xf32>
    %cst_27 = arith.constant 2.000000e+00 : f32
    %51 = vector.broadcast %cst_27 : f32 to vector<8x128xf32>
    %52 = arith.mulf %51, %50 : vector<8x128xf32>
    %53 = arith.mulf %34, %34 : vector<8x128xf32>
    %cst_28 = arith.constant -5.000000e-01 : f32
    %54 = vector.broadcast %cst_28 : f32 to vector<8x128xf32>
    %55 = arith.mulf %54, %53 : vector<8x128xf32>
    %56 = arith.subf %55, %52 : vector<8x128xf32>
    %cst_29 = arith.constant dense<0.000000e+00> : vector<8xf32>
    %57 = vector.multi_reduction <add>, %56, %cst_29 [1] : vector<8x128xf32> to vector<8xf32>
    %58 = vector.shape_cast %57 : vector<8xf32> to vector<8x1xf32>
    %cst_30 = arith.constant -1.000000e+00 : f32
    %cst_31 = arith.constant 1.000000e+00 : f32
    %59 = vector.broadcast %cst_30 : f32 to vector<8x128xf32>
    %60 = arith.maximumf %59, %37 : vector<8x128xf32>
    %61 = vector.broadcast %cst_31 : f32 to vector<8x128xf32>
    %62 = arith.minimumf %61, %60 : vector<8x128xf32>
    %63 = vector.broadcast %58 : vector<8x1xf32> to vector<8x128xf32>
    %64 = vector.broadcast %6 : vector<1x128xf32> to vector<8x128xf32>
    %65 = arith.mulf %63, %64 : vector<8x128xf32>
    %66 = arith.addf %62, %65 : vector<8x128xf32>
    %67 = vector.broadcast %7 : vector<1x128xf32> to vector<8x128xf32>
    %68 = arith.addf %66, %67 : vector<8x128xf32>
    %c0_32 = arith.constant 0 : index
    %c0_33 = arith.constant 0 : index
    %69 = vector.load %arg4[%c0_32, %c0_33] : memref<8x128xf32, #tpu.memory_space<vmem>>, vector<8x128xf32>
    tpu.vector_store %arg4[%c0_32, %c0_33], %68 {strides = array<i32>} : memref<8x128xf32, #tpu.memory_space<vmem>>, vector<8x128xf32>,
    return
  }
  func.func @transform_0(%arg0: i32) -> (i32, i32) {
    %c0_i32 = arith.constant 0 : i32
    %c0_i32_0 = arith.constant 0 : i32
    return %arg0, %c0_i32 : i32, i32
  }
  func.func @transform_1(%arg0: i32) -> (i32, i32, i32) {
    %c0_i32 = arith.constant 0 : i32
    %c0_i32_0 = arith.constant 0 : i32
    %c0_i32_1 = arith.constant 0 : i32
    %c0_i32_2 = arith.constant 0 : i32
    return %c0_i32, %c0_i32_0, %c0_i32_1 : i32, i32, i32
  }
  func.func @transform_2(%arg0: i32) -> (i32, i32) {
    %c0_i32 = arith.constant 0 : i32
    %c0_i32_0 = arith.constant 0 : i32
    %c0_i32_1 = arith.constant 0 : i32
    return %c0_i32, %c0_i32_0 : i32, i32
  }
  func.func @transform_3(%arg0: i32) -> (i32, i32) {
    %c0_i32 = arith.constant 0 : i32
    %c0_i32_0 = arith.constant 0 : i32
    return %arg0, %c0_i32 : i32, i32
  }
}

</mosaic_0001>

<llo_original>
// kernel: tpu_custom_call.1
$region0: #{tpu_custom_call.1}
  #allocation0 [shape = 'u32[]', space=smem, size = 0x4, offset = 0x4, fixed_abs, tag = 'smem constant byte address 0x4 - core index']
  #allocation1 [shape = 'u32[144,128]{1,0:T(1,128)}', space=vmem, size = 0x12000, scoped, tag = 'internal scratch']
  %s0 = inlined_call_operand.hbm [shape: f32[8,128], index: 0, kind: input, shape index: {}]
  %s1 = inlined_call_operand.hbm [shape: bf16[3,128,128], index: 1, kind: input, shape index: {}]
  %s2 = inlined_call_operand.hbm [shape: f32[8,128], index: 2, kind: input, shape index: {}]
  %s3 = inlined_call_operand.hbm [shape: f32[8,128], index: 3, kind: output, shape index: {}]
  %s4 = sld [smem:[#allocation0]]
  $region34: #{tpu_custom_call.1} parent=0
    _
  %s6 = ssub.s32 1, %s4
  %s7 = scalar_select 0, %s6, %s4
  $region1: #{tpu_custom_call.1} parent=0
    #allocation2 [shape = 'u8[4096]{0}', space=vmem, size = 0x1000, scoped, tag = 'input window, operand 0, single buffered']
    #allocation3 [shape = 's32[1]{0}', space=sflag, size = 0x4, scoped, tag = 'scoped memory for tpu_custom_call.1']
    #allocation4 [shape = 's32[1]{0}', space=sflag, size = 0x4, scoped, tag = 'scoped memory for tpu_custom_call.1']
    #allocation5 [shape = 'u8[98304]{0}', space=vmem, size = 0x18000, scoped, tag = 'input window, operand 1, single buffered']
    #allocation6 [shape = 's32[1]{0}', space=sflag, size = 0x4, scoped, tag = 'scoped memory for tpu_custom_call.1']
    #allocation7 [shape = 'u8[4096]{0}', space=vmem, size = 0x1000, scoped, tag = 'input window, operand 2, single buffered']
    #allocation8 [shape = 'u8[4096]{0}', space=vmem, size = 0x1000, scoped, tag = 'output window, operand 0, single buffered']
    %8 = vsyncpa [#allocation3], 0
    %9 = vsyncpa [#allocation6], 0
    %10 = vsyncpa [#allocation4], 0
    // Predicated region
    $region2: #{tpu_custom_call.1} parent=1 // pred_check
      _
    $region3: #{tpu_custom_call.1} parent=1 // pred_check_branch
      %12 = sbr.rel (0) target = $region5
    $region4: #{tpu_custom_call.1} parent=1 // pred_region
      %s14 = ssub.s32 128, 128
      %15 = vsyncadd [#allocation3], %s14
      %s17 = sshll.u32 [#allocation2], 4
      %s18 = int_to_ptr.vmem [resolvable:$true] %s17
      %20 = dma.hbm_to_vmem [thread:$0]  %s0, 128, %s18, [#allocation3]
    $region5: #{tpu_custom_call.1} parent=1 // pred_fallthru
      _
    // Predicated region
    $region6: #{tpu_custom_call.1} parent=1 // pred_check
      _
    $region7: #{tpu_custom_call.1} parent=1 // pred_check_branch
      %22 = sbr.rel (0) target = $region9
    $region8: #{tpu_custom_call.1} parent=1 // pred_region
      %s24 = ssub.s32 3072, 3072
      %25 = vsyncadd [#allocation6], %s24
      %s26 = sshll.u32 [#allocation5], 4
      %s27 = int_to_ptr.vmem [resolvable:$true] %s26
      %32 = dma.hbm_to_vmem [thread:$0]  %s1, 3072, %s27, [#allocation6], 64, 64, 4
    $region9: #{tpu_custom_call.1} parent=1 // pred_fallthru
      _
    // Predicated region
    $region10: #{tpu_custom_call.1} parent=1 // pred_check
      _
    $region11: #{tpu_custom_call.1} parent=1 // pred_check_branch
      %34 = sbr.rel (0) target = $region13
    $region12: #{tpu_custom_call.1} parent=1 // pred_region
      %s36 = ssub.s32 128, 128
      %37 = vsyncadd [#allocation6], %s36
      %s39 = sshll.u32 [#allocation7], 4
      %s40 = int_to_ptr.vmem [resolvable:$true] %s39
      %42 = dma.hbm_to_vmem [thread:$0]  %s2, 128, %s40, [#allocation6]
    $region13: #{tpu_custom_call.1} parent=1 // pred_fallthru
      _
    // Predicated region
    $region14: #{tpu_custom_call.1} parent=1 // pred_check
      _
    $region15: #{tpu_custom_call.1} parent=1 // pred_check_branch
      %44 = sbr.rel (0) target = $region17
    $region16: #{tpu_custom_call.1} parent=1 // pred_region
      %45 = dma.done [#allocation3], 128
    $region17: #{tpu_custom_call.1} parent=1 // pred_fallthru
      _
    // Predicated region
    $region18: #{tpu_custom_call.1} parent=1 // pred_check
      _
    $region19: #{tpu_custom_call.1} parent=1 // pred_check_branch
      %47 = sbr.rel (0) target = $region21
    $region20: #{tpu_custom_call.1} parent=1 // pred_region
      %48 = dma.done [#allocation6], 3072
    $region21: #{tpu_custom_call.1} parent=1 // pred_fallthru
      _
    // Predicated region
    $region22: #{tpu_custom_call.1} parent=1 // pred_check
      _
    $region23: #{tpu_custom_call.1} parent=1 // pred_check_branch
      %50 = sbr.rel (0) target = $region25
    $region24: #{tpu_custom_call.1} parent=1 // pred_region
      %51 = dma.done [#allocation6], 128
    $region25: #{tpu_custom_call.1} parent=1 // pred_fallthru
      _
    %v53 = vld [vmem:[#allocation2] sm:$0xff]
    %v54 = vld [vmem:[#allocation7] sm:$0x1]
    %v55 = vld [vmem:[#allocation7 + $0x1] sm:$0x1]
    %v56 = vld [vmem:[#allocation7 + $0x2] sm:$0x1]
    %v57 = vld [vmem:[#allocation7 + $0x3] sm:$0x1]
    %v58 = vld [vmem:[#allocation7 + $0x4] sm:$0x1]
    %v59 = vld [vmem:[#allocation7 + $0x5] sm:$0x1]
    %v60 = vld [vmem:[#allocation7 + $0x6] sm:$0x1]
    %v61 = vpack.c.bf16 %v53, %v53
    %v62 = vld [vmem:[#allocation5] sm:$0xf]
    %v63 = vld [vmem:[#allocation5 + $0x4] sm:$0xf]
    %v64 = vld [vmem:[#allocation5 + $0x8] sm:$0xf]
    %v65 = vld [vmem:[#allocation5 + $0xc] sm:$0xf]
    %v66 = vld [vmem:[#allocation5 + $0x10] sm:$0xf]
    %v67 = vld [vmem:[#allocation5 + $0x14] sm:$0xf]
    %v68 = vld [vmem:[#allocation5 + $0x18] sm:$0xf]
    %v69 = vld [vmem:[#allocation5 + $0x1c] sm:$0xf]
    %v70 = vld [vmem:[#allocation5 + $0x20] sm:$0xf]
    %v71 = vld [vmem:[#allocation5 + $0x24] sm:$0xf]
    %v72 = vld [vmem:[#allocation5 + $0x28] sm:$0xf]
    %v73 = vld [vmem:[#allocation5 + $0x2c] sm:$0xf]
    %v74 = vld [vmem:[#allocation5 + $0x30] sm:$0xf]
    %v75 = vld [vmem:[#allocation5 + $0x34] sm:$0xf]
    %v76 = vld [vmem:[#allocation5 + $0x38] sm:$0xf]
    %v77 = vld [vmem:[#allocation5 + $0x3c] sm:$0xf]
    %v78 = vlaneseq
    %v79 = vshrl.u32 %v78, 7
    %v80 = vsub.s32 0, %v79
    %v81 = vrot.slane %v54, %v80
    %v98 = vunpack.c.l.b16 %v62
    %v99 = vunpack.c.l.b16 %v63
    %v100 = vunpack.c.l.b16 %v64
    %v101 = vunpack.c.l.b16 %v65
    %v102 = vunpack.c.l.b16 %v66
    %v103 = vunpack.c.l.b16 %v67
    %v104 = vunpack.c.l.b16 %v68
    %v105 = vunpack.c.l.b16 %v69
    %v106 = vunpack.c.l.b16 %v70
    %v107 = vunpack.c.l.b16 %v71
    %v108 = vunpack.c.l.b16 %v72
    %v109 = vunpack.c.l.b16 %v73
    %v110 = vunpack.c.l.b16 %v74
    %v111 = vunpack.c.l.b16 %v75
    %v112 = vunpack.c.l.b16 %v76
    %v113 = vunpack.c.l.b16 %v77
    %v114 = vpack.c.b16 %v99, %v98
    %v115 = vpack.c.b16 %v101, %v100
    %v116 = vpack.c.b16 %v103, %v102
    %v117 = vpack.c.b16 %v105, %v104
    %v118 = vpack.c.b16 %v107, %v106
    %v119 = vpack.c.b16 %v109, %v108
    %v120 = vpack.c.b16 %v111, %v110
    %v121 = vpack.c.b16 %v113, %v112
    %130 = vmatprep.subr.bf16.mxu0 0
    %131 = vmatpush1.bf16.msra.mxu0 %v114
    %132 = vmatprep.subr.bf16.mxu0 0
    %133 = vmatpush1.bf16.msra.mxu0 %v115
    %134 = vmatprep.subr.bf16.mxu0 0
    %135 = vmatpush1.bf16.msra.mxu0 %v116
    %136 = vmatprep.subr.bf16.mxu0 0
    %137 = vmatpush1.bf16.msra.mxu0 %v117
    %138 = vmatprep.subr.bf16.mxu0 0
    %139 = vmatpush1.bf16.msra.mxu0 %v118
    %140 = vmatprep.subr.bf16.mxu0 0
    %141 = vmatpush1.bf16.msra.mxu0 %v119
    %142 = vmatprep.subr.bf16.mxu0 0
    %143 = vmatpush1.bf16.msra.mxu0 %v120
    %144 = vmatprep.subr.bf16.mxu0 0
    %145 = vmatpush1.bf16.msra.mxu0 %v121
    %146 = vmatprep.subr.bf16.mxu0 0
    %147 = vmatpush1.bf16.msra.mxu0 0
    %148 = vmatprep.subr.bf16.mxu0 0
    %149 = vmatpush1.bf16.msra.mxu0 0
    %150 = vmatprep.subr.bf16.mxu0 0
    %151 = vmatpush1.bf16.msra.mxu0 0
    %152 = vmatprep.subr.bf16.mxu0 0
    %153 = vmatpush1.bf16.msra.mxu0 0
    %154 = vmatprep.subr.bf16.mxu0 0
    %155 = vmatpush1.bf16.msra.mxu0 0
    %156 = vmatprep.subr.bf16.mxu0 0
    %157 = vmatpush1.bf16.msra.mxu0 0
    %158 = vmatprep.subr.bf16.mxu0 0
    %159 = vmatpush1.bf16.msra.mxu0 0
    %160 = vmatprep.subr.bf16.mxu0 0
    %161 = vmatpush1.bf16.msra.mxu0 0
    %162 = vmatprep.mubr.bf16.mxu0 0
    %163 = vmatmul.mubr.bf16.gmra.mrb[0].mxu0 %v61
    %v164 = vpop.f32.mrb[0].mxu0
    %v165 = vadd.f32 %v81, %v164
    %v166 = vpop.f32.mrb[0].mxu0
    %v167 = vpop.f32.mrb[0].mxu0
    %v168 = vpop.f32.mrb[0].mxu0
    %169 = vdwg.mxu0
    %v170 = vmax.f32 %v165, 0.0
    %v171 = vpack.c.bf16 %v170, %v170
    %s172 = scalar_lea.vmem [#allocation5], 64
    %v173 = vld [vmem:[%s172] sm:$0xf]
    %v174 = vld [vmem:[%s172 + $0x4] sm:$0xf]
    %v175 = vld [vmem:[%s172 + $0x8] sm:$0xf]
    %v176 = vld [vmem:[%s172 + $0xc] sm:$0xf]
    %v177 = vld [vmem:[%s172 + $0x10] sm:$0xf]
    %v178 = vld [vmem:[%s172 + $0x14] sm:$0xf]
    %v179 = vld [vmem:[%s172 + $0x18] sm:$0xf]
    %v180 = vld [vmem:[%s172 + $0x1c] sm:$0xf]
    %v181 = vld [vmem:[%s172 + $0x20] sm:$0xf]
    %v182 = vld [vmem:[%s172 + $0x24] sm:$0xf]
    %v183 = vld [vmem:[%s172 + $0x28] sm:$0xf]
    %v184 = vld [vmem:[%s172 + $0x2c] sm:$0xf]
    %v185 = vld [vmem:[%s172 + $0x30] sm:$0xf]
    %v186 = vld [vmem:[%s172 + $0x34] sm:$0xf]
    %v187 = vld [vmem:[%s172 + $0x38] sm:$0xf]
    %v188 = vld [vmem:[%s172 + $0x3c] sm:$0xf]
    %v189 = vlaneseq
    %v190 = vshrl.u32 %v189, 7
    %v191 = vsub.s32 0, %v190
    %v192 = vrot.slane %v55, %v191
    %v209 = vunpack.c.l.b16 %v173
    %v210 = vunpack.c.l.b16 %v174
    %v211 = vunpack.c.l.b16 %v175
    %v212 = vunpack.c.l.b16 %v176
    %v213 = vunpack.c.l.b16 %v177
    %v214 = vunpack.c.l.b16 %v178
    %v215 = vunpack.c.l.b16 %v179
    %v216 = vunpack.c.l.b16 %v180
    %v217 = vunpack.c.l.b16 %v181
    %v218 = vunpack.c.l.b16 %v182
    %v219 = vunpack.c.l.b16 %v183
    %v220 = vunpack.c.l.b16 %v184
    %v221 = vunpack.c.l.b16 %v185
    %v222 = vunpack.c.l.b16 %v186
    %v223 = vunpack.c.l.b16 %v187
    %v224 = vunpack.c.l.b16 %v188
    %v225 = vpack.c.b16 %v210, %v209
    %v226 = vpack.c.b16 %v212, %v211
    %v227 = vpack.c.b16 %v214, %v213
    %v228 = vpack.c.b16 %v216, %v215
    %v229 = vpack.c.b16 %v218, %v217
    %v230 = vpack.c.b16 %v220, %v219
    %v231 = vpack.c.b16 %v222, %v221
    %v232 = vpack.c.b16 %v224, %v223
    %241 = vmatprep.subr.bf16.mxu0 0
    %242 = vmatpush1.bf16.msra.mxu0 %v225
    %243 = vmatprep.subr.bf16.mxu0 0
    %244 = vmatpush1.bf16.msra.mxu0 %v226
    %245 = vmatprep.subr.bf16.mxu0 0
    %246 = vmatpush1.bf16.msra.mxu0 %v227
    %247 = vmatprep.subr.bf16.mxu0 0
    %248 = vmatpush1.bf16.msra.mxu0 %v228
    %249 = vmatprep.subr.bf16.mxu0 0
    %250 = vmatpush1.bf16.msra.mxu0 %v229
    %251 = vmatprep.subr.bf16.mxu0 0
    %252 = vmatpush1.bf16.msra.mxu0 %v230
    %253 = vmatprep.subr.bf16.mxu0 0
    %254 = vmatpush1.bf16.msra.mxu0 %v231
    %255 = vmatprep.subr.bf16.mxu0 0
    %256 = vmatpush1.bf16.msra.mxu0 %v232
    %257 = vmatprep.subr.bf16.mxu0 0
    %258 = vmatpush1.bf16.msra.mxu0 0
    %259 = vmatprep.subr.bf16.mxu0 0
    %260 = vmatpush1.bf16.msra.mxu0 0
    %261 = vmatprep.subr.bf16.mxu0 0
    %262 = vmatpush1.bf16.msra.mxu0 0
    %263 = vmatprep.subr.bf16.mxu0 0
    %264 = vmatpush1.bf16.msra.mxu0 0
    %265 = vmatprep.subr.bf16.mxu0 0
    %266 = vmatpush1.bf16.msra.mxu0 0
    %267 = vmatprep.subr.bf16.mxu0 0
    %268 = vmatpush1.bf16.msra.mxu0 0
    %269 = vmatprep.subr.bf16.mxu0 0
    %270 = vmatpush1.bf16.msra.mxu0 0
    %271 = vmatprep.subr.bf16.mxu0 0
    %272 = vmatpush1.bf16.msra.mxu0 0
    %273 = vmatprep.mubr.bf16.mxu0 0
    %274 = vmatmul.mubr.bf16.gmra.mrb[0].mxu0 %v171
    %v275 = vpop.f32.mrb[0].mxu0
    %v276 = vadd.f32 %v192, %v275
    %v277 = vpop.f32.mrb[0].mxu0
    %v278 = vpop.f32.mrb[0].mxu0
    %v279 = vpop.f32.mrb[0].mxu0
    %280 = vdwg.mxu0
    %v281 = vmax.f32 %v276, 0.0
    %v282 = vpack.c.bf16 %v281, %v281
    %s283 = scalar_lea.vmem [#allocation5], 128
    %v284 = vld [vmem:[%s283] sm:$0xf]
    %v285 = vld [vmem:[%s283 + $0x4] sm:$0xf]
    %v286 = vld [vmem:[%s283 + $0x8] sm:$0xf]
    %v287 = vld [vmem:[%s283 + $0xc] sm:$0xf]
    %v288 = vld [vmem:[%s283 + $0x10] sm:$0xf]
    %v289 = vld [vmem:[%s283 + $0x14] sm:$0xf]
    %v290 = vld [vmem:[%s283 + $0x18] sm:$0xf]
    %v291 = vld [vmem:[%s283 + $0x1c] sm:$0xf]
    %v292 = vld [vmem:[%s283 + $0x20] sm:$0xf]
    %v293 = vld [vmem:[%s283 + $0x24] sm:$0xf]
    %v294 = vld [vmem:[%s283 + $0x28] sm:$0xf]
    %v295 = vld [vmem:[%s283 + $0x2c] sm:$0xf]
    %v296 = vld [vmem:[%s283 + $0x30] sm:$0xf]
    %v297 = vld [vmem:[%s283 + $0x34] sm:$0xf]
    %v298 = vld [vmem:[%s283 + $0x38] sm:$0xf]
    %v299 = vld [vmem:[%s283 + $0x3c] sm:$0xf]
    %v300 = vlaneseq
    %v301 = vshrl.u32 %v300, 7
    %v302 = vsub.s32 0, %v301
    %v303 = vrot.slane %v56, %v302
    %v320 = vunpack.c.l.b16 %v284
    %v321 = vunpack.c.l.b16 %v285
    %v322 = vunpack.c.l.b16 %v286
    %v323 = vunpack.c.l.b16 %v287
    %v324 = vunpack.c.l.b16 %v288
    %v325 = vunpack.c.l.b16 %v289
    %v326 = vunpack.c.l.b16 %v290
    %v327 = vunpack.c.l.b16 %v291
    %v328 = vunpack.c.l.b16 %v292
    %v329 = vunpack.c.l.b16 %v293
    %v330 = vunpack.c.l.b16 %v294
    %v331 = vunpack.c.l.b16 %v295
    %v332 = vunpack.c.l.b16 %v296
    %v333 = vunpack.c.l.b16 %v297
    %v334 = vunpack.c.l.b16 %v298
    %v335 = vunpack.c.l.b16 %v299
    %v336 = vpack.c.b16 %v321, %v320
    %v337 = vpack.c.b16 %v323, %v322
    %v338 = vpack.c.b16 %v325, %v324
    %v339 = vpack.c.b16 %v327, %v326
    %v340 = vpack.c.b16 %v329, %v328
    %v341 = vpack.c.b16 %v331, %v330
    %v342 = vpack.c.b16 %v333, %v332
    %v343 = vpack.c.b16 %v335, %v334
    %352 = vmatprep.subr.bf16.mxu0 0
    %353 = vmatpush1.bf16.msra.mxu0 %v336
    %354 = vmatprep.subr.bf16.mxu0 0
    %355 = vmatpush1.bf16.msra.mxu0 %v337
    %356 = vmatprep.subr.bf16.mxu0 0
    %357 = vmatpush1.bf16.msra.mxu0 %v338
    %358 = vmatprep.subr.bf16.mxu0 0
    %359 = vmatpush1.bf16.msra.mxu0 %v339
    %360 = vmatprep.subr.bf16.mxu0 0
    %361 = vmatpush1.bf16.msra.mxu0 %v340
    %362 = vmatprep.subr.bf16.mxu0 0
    %363 = vmatpush1.bf16.msra.mxu0 %v341
    %364 = vmatprep.subr.bf16.mxu0 0
    %365 = vmatpush1.bf16.msra.mxu0 %v342
    %366 = vmatprep.subr.bf16.mxu0 0
    %367 = vmatpush1.bf16.msra.mxu0 %v343
    %368 = vmatprep.subr.bf16.mxu0 0
    %369 = vmatpush1.bf16.msra.mxu0 0
    %370 = vmatprep.subr.bf16.mxu0 0
    %371 = vmatpush1.bf16.msra.mxu0 0
    %372 = vmatprep.subr.bf16.mxu0 0
    %373 = vmatpush1.bf16.msra.mxu0 0
    %374 = vmatprep.subr.bf16.mxu0 0
    %375 = vmatpush1.bf16.msra.mxu0 0
    %376 = vmatprep.subr.bf16.mxu0 0
    %377 = vmatpush1.bf16.msra.mxu0 0
    %378 = vmatprep.subr.bf16.mxu0 0
    %379 = vmatpush1.bf16.msra.mxu0 0
    %380 = vmatprep.subr.bf16.mxu0 0
    %381 = vmatpush1.bf16.msra.mxu0 0
    %382 = vmatprep.subr.bf16.mxu0 0
    %383 = vmatpush1.bf16.msra.mxu0 0
    %384 = vmatprep.mubr.bf16.mxu0 0
    %385 = vmatmul.mubr.bf16.gmra.mrb[0].mxu0 %v282
    %v386 = vpop.f32.mrb[0].mxu0
    %v387 = vadd.f32 %v303, %v386
    %v388 = vpop.f32.mrb[0].mxu0
    %v389 = vpop.f32.mrb[0].mxu0
    %v390 = vpop.f32.mrb[0].mxu0
    %391 = vdwg.mxu0
    %v392 = vtanh.pop %v387
    %v393 = vlaneseq
    %v394 = vshrl.u32 %v393, 7
    %v395 = vsub.s32 0, %v394
    %v396 = vrot.slane %v58, %v395
    %v397 = vmul.f32 %v53, %v396
    %v398 = vlaneseq
    %v399 = vshrl.u32 %v398, 7
    %v400 = vsub.s32 0, %v399
    %v401 = vrot.slane %v57, %v400
    %v402 = vmul.f32 %v401, %v397
    %v403 = vadd.f32 %v392, %v402
    %v404 = vsub.f32 0.6931472, %v403
    %v405 = vmul.f32 %v403, -2.0
    %v406 = vmax.f32 %v405, 0.0
    %v407 = vand.u32 2147483647, %v405
    %v408 = vsub.f32 0.0, %v407
    %v409 = vmul.f32 %v408, 1.442695
    %v410 = vpow.pop %v409
    %v411 = vadd.f32 %v410, 1.0
    %v412 = vlog2.pop %v411
    %v413 = vmul.f32 %v412, 0.6931472
    %v414 = vmul.f32 -0.5, %v410
    %v415 = vadd.f32 %v414, 1.0
    %v416 = vmul.f32 %v415, %v410
    %v417 = vand.u32 2147483647, %v410
    %vm418 = vcmp.lt.f32.partialorder %v417, 0.0004427343
    %v419 = vsel %vm418, %v416, %v413
    %v420 = vadd.f32 %v406, %v419
    %v421 = vsub.f32 %v404, %v420
    %v422 = vmul.f32 %v421, 2.0
    %v423 = vmul.f32 %v397, %v397
    %v424 = vmul.f32 %v423, -0.5
    %v425 = vsub.f32 %v424, %v422
    %426 = vadd.xlane.f32.xlu0 %v425
    %v427 = vpop.xlane.xlu0 %426
    %v428 = vmax.f32 %v403, -1.0
    %v429 = vmin.f32 %v428, 1.0
    %v430 = vlaneseq
    %v431 = vshrl.u32 %v430, 7
    %v432 = vsub.s32 0, %v431
    %v433 = vrot.slane %v59, %v432
    %v434 = vmul.f32 %v427, %v433
    %v435 = vadd.f32 %v429, %v434
    %v436 = vlaneseq
    %v437 = vshrl.u32 %v436, 7
    %v438 = vsub.s32 0, %v437
    %v439 = vrot.slane %v60, %v438
    %v440 = vadd.f32 %v435, %v439
    %441 = vst [vmem:[#allocation8] sm:$0xff] %v440
    // Predicated region
    $region26: #{tpu_custom_call.1} parent=1 // pred_check
      _
    $region27: #{tpu_custom_call.1} parent=1 // pred_check_branch
      %443 = sbr.rel (0) target = $region29
    $region28: #{tpu_custom_call.1} parent=1 // pred_region
      %s445 = ssub.s32 128, 128
      %446 = vsyncadd [#allocation4], %s445
      %s448 = sshll.u32 [#allocation8], 4
      %s449 = int_to_ptr.vmem [resolvable:$true] %s448
      %451 = dma.vmem_to_hbm [thread:$0]  %s449, 128, %s3, [#allocation4]
    $region29: #{tpu_custom_call.1} parent=1 // pred_fallthru
      _
    // Predicated region
    $region30: #{tpu_custom_call.1} parent=1 // pred_check
      _
    $region31: #{tpu_custom_call.1} parent=1 // pred_check_branch
      %453 = sbr.rel (0) target = $region33
    $region32: #{tpu_custom_call.1} parent=1 // pred_region
      %454 = dma.done [#allocation4], 128
    $region33: #{tpu_custom_call.1} parent=1 // pred_fallthru
      _
    %455 = vsyncpa [#allocation3], 1
    %456 = vsyncpa [#allocation6], 1
    %457 = vsyncpa [#allocation4], 1

</llo_original>
